<compile_context>
chip_gen: v7x
topology: tpu7x:2x2x1
jax: 0.10.0
libtpu: 0.0.40
codegen_flags: <defaults>
</compile_context>

<pallas_src>
import jax
import jax.numpy as jnp
from jax.experimental import pallas as pl
from jax.experimental.pallas import tpu as pltpu


def _afm_kernel(enc_ref, dec_ref, hi_ref, w1_ref, w2_ref, o_ref):
    # enc/dec/hi refs: (Bt, Cin, HW) blocks; w1: (C, Cr); w2: (Cr, C); o: (Bt, C, HW)
    enc = enc_ref[...]
    dec = dec_ref[...]
    hi = hi_ref[...]
    cin = enc.shape[1]

    # Squeeze: global average pool over spatial positions, accumulated in f32.
    m_e = jnp.mean(enc.astype(jnp.float32), axis=-1)          # (Bt, Cin)
    m_d = jnp.mean(dec.astype(jnp.float32), axis=-1)          # (Bt, Cin)
    m_h = jnp.mean(hi.astype(jnp.float32), axis=-1)           # (Bt, Cin)
    # Channel order matches torch.cat([encoder, decoder, higherencoder], dim=1).
    pooled = jnp.concatenate([m_e, m_d, m_h], axis=-1)        # (Bt, C)

    # Excite: FC -> ReLU -> FC -> Sigmoid (both FCs bias-free, as in SELayer).
    y = jnp.dot(pooled, w1_ref[...], preferred_element_type=jnp.float32)   # (Bt, Cr)
    y = jnp.maximum(y, 0.0)
    gate = jax.nn.sigmoid(
        jnp.dot(y, w2_ref[...], preferred_element_type=jnp.float32))       # (Bt, C)

    # Scale: per-channel rescale of each group, written to its channel slice.
    o_ref[:, 0 * cin:1 * cin, :] = (
        enc.astype(jnp.float32) * gate[:, 0 * cin:1 * cin, None]).astype(o_ref.dtype)
    o_ref[:, 1 * cin:2 * cin, :] = (
        dec.astype(jnp.float32) * gate[:, 1 * cin:2 * cin, None]).astype(o_ref.dtype)
    o_ref[:, 2 * cin:3 * cin, :] = (
        hi.astype(jnp.float32) * gate[:, 2 * cin:3 * cin, None]).astype(o_ref.dtype)


def afm_forward(higherencoder, encoder, decoder, w1, w2,
                *, vmem_block_budget_bytes=12 * 1024 * 1024):
    """AFM.forward: fuse = cat([encoder, decoder, higherencoder], dim=1); SELayer(fuse)."""
    B, Cin, H, W = encoder.shape
    HW = H * W
    C = 3 * Cin
    Cr = w1.shape[1]
    dtype = encoder.dtype
    itemsize = jnp.dtype(dtype).itemsize

    # Bytes per batch element per grid step: 3 inputs (Cin*HW each) + 1 output (C*HW),
    # double-buffered -> 4 * C * HW * itemsize. Keep under a conservative budget so
    # the kernel fits the default scoped VMEM on v5e/v6e/v7x without tuning.
    per_batch_elem = 4 * C * HW * itemsize
    bt_cap = max(1, min(vmem_block_budget_bytes // per_batch_elem, B))
    if B > 1:
        # Keep at least 2 grid steps so the parallel axis can be sharded across
        # TensorCores (v7x megacore).
        bt_cap = min(bt_cap, max(1, B // 2))
    bt = max(d for d in range(1, bt_cap + 1) if B % d == 0)
    grid = (B // bt,)

    enc = encoder.reshape(B, Cin, HW)
    dec = decoder.reshape(B, Cin, HW)
    hi = higherencoder.reshape(B, Cin, HW)

    feat_spec = pl.BlockSpec((bt, Cin, HW), lambda b: (b, 0, 0))

    out = pl.pallas_call(
        _afm_kernel,
        out_shape=jax.ShapeDtypeStruct((B, C, HW), dtype),
        grid_spec=pltpu.PrefetchScalarGridSpec(
            num_scalar_prefetch=0,
            grid=grid,
            in_specs=[
                feat_spec,                                       # encoder
                feat_spec,                                       # decoder
                feat_spec,                                       # higherencoder
                pl.BlockSpec((C, Cr), lambda b: (0, 0)),         # w1
                pl.BlockSpec((Cr, C), lambda b: (0, 0)),         # w2
            ],
            out_specs=pl.BlockSpec((bt, C, HW), lambda b: (b, 0, 0)),
        ),
        compiler_params=pltpu.CompilerParams(
            dimension_semantics=("parallel",),
            vmem_limit_bytes=32 * 1024 * 1024,
        ),
    )(enc, dec, hi, w1, w2)

    return out.reshape(B, C, H, W)


def _reference(higherencoder, encoder, decoder, w1, w2):
    fuse = jnp.concatenate([encoder, decoder, higherencoder], axis=1)
    y = jnp.mean(fuse.astype(jnp.float32), axis=(2, 3))         # (B, C)
    y = jnp.maximum(y @ w1, 0.0)                                 # (B, C//r)
    y = jax.nn.sigmoid(y @ w2)                                   # (B, C)
    return (fuse.astype(jnp.float32) * y[:, :, None, None]).astype(fuse.dtype)


if __name__ == "__main__":
    key = jax.random.PRNGKey(0)
    B, Cin, H, W = 2, 16, 16, 16      # HW = 256 -> lane-dense stores
    C = 3 * Cin                       # all_channels = 48
    reduction = 16
    Cr = C // reduction               # 3

    k1, k2, k3, k4, k5 = jax.random.split(key, 5)
    higherencoder = jax.random.normal(k1, (B, Cin, H, W), dtype=jnp.float32)
    encoder = jax.random.normal(k2, (B, Cin, H, W), dtype=jnp.float32)
    decoder = jax.random.normal(k3, (B, Cin, H, W), dtype=jnp.float32)
    # SELayer FC weights (bias-free). Stored as (in, out) so y @ W matches nn.Linear.
    w1 = jax.random.normal(k4, (C, Cr), dtype=jnp.float32) * 0.1
    w2 = jax.random.normal(k5, (Cr, C), dtype=jnp.float32) * 0.1

    out = afm_forward(higherencoder, encoder, decoder, w1, w2)
    jax.block_until_ready(out)

    ref = _reference(higherencoder, encoder, decoder, w1, w2)
    assert out.shape == (B, C, H, W)
    assert jnp.allclose(out, ref, atol=1e-5, rtol=1e-5)
    print("KERNEL_OK")
</pallas_src>

<mosaic_0001>
module attributes {stable_mosaic.version = 11 : i64} {
  func.func @_afm_kernel(%arg0: i32, %arg1: memref<1x16x256xf32, #tpu.memory_space<vmem>>, %arg2: memref<1x16x256xf32, #tpu.memory_space<vmem>>, %arg3: memref<1x16x256xf32, #tpu.memory_space<vmem>>, %arg4: memref<48x3xf32, #tpu.memory_space<vmem>>, %arg5: memref<3x48xf32, #tpu.memory_space<vmem>>, %arg6: memref<1x48x256xf32, #tpu.memory_space<vmem>>) attributes {dimension_semantics = [#tpu.dimension_semantics<parallel>], iteration_bounds = array<i64: 2>, scalar_prefetch = 0 : i64, scratch_operands = 0 : i64, tpu.core_type = #tpu.core_type<tc>, window_params = [{transform_indices = @transform_0, window_bounds = array<i64: 1, 16, 256>}, {transform_indices = @transform_1, window_bounds = array<i64: 1, 16, 256>}, {transform_indices = @transform_2, window_bounds = array<i64: 1, 16, 256>}, {pipeline_mode = #tpu.pipeline_mode<synchronous>, transform_indices = @transform_3, window_bounds = array<i64: 48, 3>}, {pipeline_mode = #tpu.pipeline_mode<synchronous>, transform_indices = @transform_4, window_bounds = array<i64: 3, 48>}, {transform_indices = @transform_5, window_bounds = array<i64: 1, 48, 256>}]} {
    %c0 = arith.constant 0 : index
    %c0_0 = arith.constant 0 : index
    %c0_1 = arith.constant 0 : index
    %0 = vector.load %arg1[%c0, %c0_0, %c0_1] : memref<1x16x256xf32, #tpu.memory_space<vmem>>, vector<1x16x256xf32>
    %c0_2 = arith.constant 0 : index
    %c0_3 = arith.constant 0 : index
    %c0_4 = arith.constant 0 : index
    %1 = vector.load %arg2[%c0_2, %c0_3, %c0_4] : memref<1x16x256xf32, #tpu.memory_space<vmem>>, vector<1x16x256xf32>
    %c0_5 = arith.constant 0 : index
    %c0_6 = arith.constant 0 : index
    %c0_7 = arith.constant 0 : index
    %2 = vector.load %arg3[%c0_5, %c0_6, %c0_7] : memref<1x16x256xf32, #tpu.memory_space<vmem>>, vector<1x16x256xf32>
    %cst = arith.constant dense<0.000000e+00> : vector<1x16xf32>
    %3 = vector.multi_reduction <add>, %0, %cst [2] : vector<1x16x256xf32> to vector<1x16xf32>
    %cst_8 = arith.constant 2.560000e+02 : f32
    %4 = vector.broadcast %cst_8 : f32 to vector<1x16xf32>
    %5 = arith.divf %3, %4 : vector<1x16xf32>
    %cst_9 = arith.constant dense<0.000000e+00> : vector<1x16xf32>
    %6 = vector.multi_reduction <add>, %1, %cst_9 [2] : vector<1x16x256xf32> to vector<1x16xf32>
    %cst_10 = arith.constant 2.560000e+02 : f32
    %7 = vector.broadcast %cst_10 : f32 to vector<1x16xf32>
    %8 = arith.divf %6, %7 : vector<1x16xf32>
    %cst_11 = arith.constant dense<0.000000e+00> : vector<1x16xf32>
    %9 = vector.multi_reduction <add>, %2, %cst_11 [2] : vector<1x16x256xf32> to vector<1x16xf32>
    %cst_12 = arith.constant 2.560000e+02 : f32
    %10 = vector.broadcast %cst_12 : f32 to vector<1x16xf32>
    %11 = arith.divf %9, %10 : vector<1x16xf32>
    %12 = tpu.concatenate %5, %8, %11 in 1 : vector<1x16xf32>, vector<1x16xf32>, vector<1x16xf32> -> vector<1x48xf32>
    %c0_13 = arith.constant 0 : index
    %c0_14 = arith.constant 0 : index
    %13 = vector.load %arg4[%c0_13, %c0_14] : memref<48x3xf32, #tpu.memory_space<vmem>>, vector<48x3xf32>
    %cst_15 = arith.constant dense<0.000000e+00> : vector<1x3xf32>
    %14 = tpu.matmul %12, %13, %cst_15 {dimension_numbers = #tpu.dot_dimension_numbers<[1], [0], [0], [1], [0, 0, 1, 1], [], []>} : vector<1x48xf32>, vector<48x3xf32>, vector<1x3xf32> -> vector<1x3xf32>
    %cst_16 = arith.constant 0.000000e+00 : f32
    %15 = vector.broadcast %cst_16 : f32 to vector<1x3xf32>
    %16 = arith.maximumf %14, %15 : vector<1x3xf32>
    %c0_17 = arith.constant 0 : index
    %c0_18 = arith.constant 0 : index
    %17 = vector.load %arg5[%c0_17, %c0_18] : memref<3x48xf32, #tpu.memory_space<vmem>>, vector<3x48xf32>
    %cst_19 = arith.constant dense<0.000000e+00> : vector<1x48xf32>
    %18 = tpu.matmul %16, %17, %cst_19 {dimension_numbers = #tpu.dot_dimension_numbers<[1], [0], [0], [1], [0, 0, 1, 1], [], []>} : vector<1x3xf32>, vector<3x48xf32>, vector<1x48xf32> -> vector<1x48xf32>
    %19 = arith.negf %18 : vector<1x48xf32>
    %20 = math.exp %19 : vector<1x48xf32>
    %cst_20 = arith.constant 1.000000e+00 : f32
    %21 = vector.broadcast %cst_20 : f32 to vector<1x48xf32>
    %22 = arith.addf %21, %20 : vector<1x48xf32>
    %23 = arith.divf %21, %22 : vector<1x48xf32>
    %24 = vector.extract_strided_slice %23 {offsets = [0, 0], sizes = [1, 16], strides = [1, 1]} : vector<1x48xf32> to vector<1x16xf32>
    %25 = vector.shape_cast %24 : vector<1x16xf32> to vector<1x16x1xf32>
    %26 = vector.broadcast %25 : vector<1x16x1xf32> to vector<1x16x256xf32>
    %27 = arith.mulf %0, %26 : vector<1x16x256xf32>
    %c0_21 = arith.constant 0 : index
    %c0_22 = arith.constant 0 : index
    %c0_23 = arith.constant 0 : index
    %28 = vector.load %arg6[%c0_21, %c0_22, %c0_23] : memref<1x48x256xf32, #tpu.memory_space<vmem>>, vector<1x16x256xf32>
    tpu.vector_store %arg6[%c0_21, %c0_22, %c0_23], %27 {strides = array<i32>} : memref<1x48x256xf32, #tpu.memory_space<vmem>>, vector<1x16x256xf32>,
    %29 = vector.extract_strided_slice %23 {offsets = [0, 16], sizes = [1, 16], strides = [1, 1]} : vector<1x48xf32> to vector<1x16xf32>
    %30 = vector.shape_cast %29 : vector<1x16xf32> to vector<1x16x1xf32>
    %31 = vector.broadcast %30 : vector<1x16x1xf32> to vector<1x16x256xf32>
    %32 = arith.mulf %1, %31 : vector<1x16x256xf32>
    %c0_24 = arith.constant 0 : index
    %c16 = arith.constant 16 : index
    %c0_25 = arith.constant 0 : index
    %33 = vector.load %arg6[%c0_24, %c16, %c0_25] : memref<1x48x256xf32, #tpu.memory_space<vmem>>, vector<1x16x256xf32>
    tpu.vector_store %arg6[%c0_24, %c16, %c0_25], %32 {strides = array<i32>} : memref<1x48x256xf32, #tpu.memory_space<vmem>>, vector<1x16x256xf32>,
    %34 = vector.extract_strided_slice %23 {offsets = [0, 32], sizes = [1, 16], strides = [1, 1]} : vector<1x48xf32> to vector<1x16xf32>
    %35 = vector.shape_cast %34 : vector<1x16xf32> to vector<1x16x1xf32>
    %36 = vector.broadcast %35 : vector<1x16x1xf32> to vector<1x16x256xf32>
    %37 = arith.mulf %2, %36 : vector<1x16x256xf32>
    %c0_26 = arith.constant 0 : index
    %c32 = arith.constant 32 : index
    %c0_27 = arith.constant 0 : index
    %38 = vector.load %arg6[%c0_26, %c32, %c0_27] : memref<1x48x256xf32, #tpu.memory_space<vmem>>, vector<1x16x256xf32>
    tpu.vector_store %arg6[%c0_26, %c32, %c0_27], %37 {strides = array<i32>} : memref<1x48x256xf32, #tpu.memory_space<vmem>>, vector<1x16x256xf32>,
    return
  }
  func.func @transform_0(%arg0: i32) -> (i32, i32, i32) {
    %c0_i32 = arith.constant 0 : i32
    %c0_i32_0 = arith.constant 0 : i32
    %c0_i32_1 = arith.constant 0 : i32
    return %arg0, %c0_i32, %c0_i32_0 : i32, i32, i32
  }
  func.func @transform_1(%arg0: i32) -> (i32, i32, i32) {
    %c0_i32 = arith.constant 0 : i32
    %c0_i32_0 = arith.constant 0 : i32
    %c0_i32_1 = arith.constant 0 : i32
    return %arg0, %c0_i32, %c0_i32_0 : i32, i32, i32
  }
  func.func @transform_2(%arg0: i32) -> (i32, i32, i32) {
    %c0_i32 = arith.constant 0 : i32
    %c0_i32_0 = arith.constant 0 : i32
    %c0_i32_1 = arith.constant 0 : i32
    return %arg0, %c0_i32, %c0_i32_0 : i32, i32, i32
  }
  func.func @transform_3(%arg0: i32) -> (i32, i32) {
    %c0_i32 = arith.constant 0 : i32
    %c0_i32_0 = arith.constant 0 : i32
    %c0_i32_1 = arith.constant 0 : i32
    return %c0_i32, %c0_i32_0 : i32, i32
  }
  func.func @transform_4(%arg0: i32) -> (i32, i32) {
    %c0_i32 = arith.constant 0 : i32
    %c0_i32_0 = arith.constant 0 : i32
    %c0_i32_1 = arith.constant 0 : i32
    return %c0_i32, %c0_i32_0 : i32, i32
  }
  func.func @transform_5(%arg0: i32) -> (i32, i32, i32) {
    %c0_i32 = arith.constant 0 : i32
    %c0_i32_0 = arith.constant 0 : i32
    %c0_i32_1 = arith.constant 0 : i32
    return %arg0, %c0_i32, %c0_i32_0 : i32, i32, i32
  }
}

</mosaic_0001>

<llo_original>
// kernel: tpu_custom_call.1
$region0: #{tpu_custom_call.1}
  #allocation0 [shape = 'u32[]', space=smem, size = 0x4, offset = 0x4, fixed_abs, tag = 'smem constant byte address 0x4 - core index']
  #allocation1 [shape = 'u32[144,128]{1,0:T(1,128)}', space=vmem, size = 0x12000, scoped, tag = 'internal scratch']
  %s0 = inlined_call_operand.hbm [shape: f32[2,16,256], index: 0, kind: input, shape index: {}]
  %s1 = inlined_call_operand.hbm [shape: f32[2,16,256], index: 1, kind: input, shape index: {}]
  %s2 = inlined_call_operand.hbm [shape: f32[2,16,256], index: 2, kind: input, shape index: {}]
  %s3 = inlined_call_operand.vmem [shape: f32[48,3], index: 3, kind: input, shape index: {}]
  %s4 = inlined_call_operand.vmem [shape: f32[3,48], index: 4, kind: input, shape index: {}]
  %s5 = inlined_call_operand.hbm [shape: f32[2,48,256], index: 5, kind: output, shape index: {}]
  %s6 = sld [smem:[#allocation0]]
  $region65: #{tpu_custom_call.1} parent=0
    _
  %s8 = ssub.s32 1, %s6
  %s9 = scalar_select 0, %s8, %s6
  $region1: #{tpu_custom_call.1} parent=0
    #allocation2 [shape = 'u8[32768]{0}', space=vmem, size = 0x8000, scoped, tag = 'input window, operand 0']
    #allocation3 [shape = 's32[2]{0}', space=sflag, size = 0x8, scoped, tag = 'scoped memory for tpu_custom_call.1']
    #allocation4 [shape = 's32[2]{0}', space=sflag, size = 0x8, scoped, tag = 'scoped memory for tpu_custom_call.1']
    #allocation5 [shape = 'u8[32768]{0}', space=vmem, size = 0x8000, scoped, tag = 'input window, operand 1']
    #allocation6 [shape = 's32[2]{0}', space=sflag, size = 0x8, scoped, tag = 'scoped memory for tpu_custom_call.1']
    #allocation7 [shape = 'u8[32768]{0}', space=vmem, size = 0x8000, scoped, tag = 'input window, operand 2']
    #allocation8 [shape = 'u8[98304]{0}', space=vmem, size = 0x18000, scoped, tag = 'output window, operand 0']
    %10 = vsyncpa [#allocation3], 0
    %s11 = scalar_lea.sflag [#allocation3], 1
    %12 = vsyncpa %s11, 0
    %13 = vsyncpa [#allocation6], 0
    %s14 = scalar_lea.sflag [#allocation6], 1
    %15 = vsyncpa %s14, 0
    %16 = vsyncpa [#allocation4], 0
    %s17 = scalar_lea.sflag [#allocation4], 1
    %18 = vsyncpa %s17, 0
    loop: start=0, step=1, limit=4
    $region2: #{tpu_custom_call.1} parent=1 // loop_pre_header
      _
    $region3: #{tpu_custom_call.1} parent=1 // loop_header
      %s20 = sphi 0, %s24
      %p21 = scmp.ge.s32.totalorder %s20, 4
      %s30 = sphi 0, %s32
      %s33 = sphi 0, %s30
      %s34 = sphi 0, %s33
      %s50 = sphi 0, %s34
      %s56 = sphi 0, %s58
      %s59 = sphi 0, %s56
      %s60 = sphi 0, %s59
      %s76 = sphi 0, %s60
      %s82 = sphi 0, %s84
      %s85 = sphi 0, %s82
      %s86 = sphi 0, %s85
      %s102 = sphi 0, %s86
      %s106 = sphi 0, %s106
      %s108 = sphi 0, %s106
      %s109 = sphi 0, %s108
      %s123 = sphi 0, %s109
      %s127 = sphi 0, %s127
      %s129 = sphi 0, %s127
      %s130 = sphi 0, %s129
      %s144 = sphi 0, %s130
      %s150 = sphi 0, %s152
      %s153 = sphi 0, %s150
      %s154 = sphi 0, %s153
      %s170 = sphi 0, %s154
    $region4: #{tpu_custom_call.1} parent=1 // loop_header_branch
      %23 = sbr.rel (%p21) target = $region8
    $region5: #{tpu_custom_call.1} parent=1 // loop_body
      %s25 = ssub.s32 %s20, 1
      %s26 = ssub.s32 %s20, 2
      %s27 = sadd.s32 %s20, 1
      %s28 = ssub.s32 %s20, %s27
      %p29 = scmp.eq.s32.totalorder %s28, 0
      %s31 = sadd.s32 %s30, 1
      %s32 = scalar_select %p29, %s30, %s31
      %p35 = pneg %p29
      %p36 = scmp.eq.s32.totalorder %s20, 1
      %p37 = por %p35, %p36
      %p38 = scmp.ne.s32.totalorder %s30, %s33
      %p39 = scmp.eq.s32.totalorder %s20, 0
      %p40 = por %p38, %p39
      %p41 = scmp.ne.s32.totalorder %s30, %s33
      %p42 = scmp.eq.s32.totalorder %s25, 1
      %p43 = por %p41, %p42
      %p44 = scmp.ne.s32.totalorder %s33, %s34
      %p45 = scmp.eq.s32.totalorder %s25, 0
      %p46 = por %p44, %p45
      %p47 = scmp.ne.s32.totalorder %s33, %s34
      %p48 = scmp.eq.s32.totalorder %s26, 1
      %p49 = por %p47, %p48
      %p51 = scmp.ne.s32.totalorder %s34, %s50
      %p52 = scmp.eq.s32.totalorder %s26, 0
      %p53 = por %p51, %p52
      %s54 = ssub.s32 %s20, %s27
      %p55 = scmp.eq.s32.totalorder %s54, 0
      %s57 = sadd.s32 %s56, 1
      %s58 = scalar_select %p55, %s56, %s57
      %p61 = pneg %p55
      %p62 = scmp.eq.s32.totalorder %s20, 1
      %p63 = por %p61, %p62
      %p64 = scmp.ne.s32.totalorder %s56, %s59
      %p65 = scmp.eq.s32.totalorder %s20, 0
      %p66 = por %p64, %p65
      %p67 = scmp.ne.s32.totalorder %s56, %s59
      %p68 = scmp.eq.s32.totalorder %s25, 1
      %p69 = por %p67, %p68
      %p70 = scmp.ne.s32.totalorder %s59, %s60
      %p71 = scmp.eq.s32.totalorder %s25, 0
      %p72 = por %p70, %p71
      %p73 = scmp.ne.s32.totalorder %s59, %s60
      %p74 = scmp.eq.s32.totalorder %s26, 1
      %p75 = por %p73, %p74
      %p77 = scmp.ne.s32.totalorder %s60, %s76
      %p78 = scmp.eq.s32.totalorder %s26, 0
      %p79 = por %p77, %p78
      %s80 = ssub.s32 %s20, %s27
      %p81 = scmp.eq.s32.totalorder %s80, 0
      %s83 = sadd.s32 %s82, 1
      %s84 = scalar_select %p81, %s82, %s83
      %p87 = pneg %p81
      %p88 = scmp.eq.s32.totalorder %s20, 1
      %p89 = por %p87, %p88
      %p90 = scmp.ne.s32.totalorder %s82, %s85
      %p91 = scmp.eq.s32.totalorder %s20, 0
      %p92 = por %p90, %p91
      %p93 = scmp.ne.s32.totalorder %s82, %s85
      %p94 = scmp.eq.s32.totalorder %s25, 1
      %p95 = por %p93, %p94
      %p96 = scmp.ne.s32.totalorder %s85, %s86
      %p97 = scmp.eq.s32.totalorder %s25, 0
      %p98 = por %p96, %p97
      %p99 = scmp.ne.s32.totalorder %s85, %s86
      %p100 = scmp.eq.s32.totalorder %s26, 1
      %p101 = por %p99, %p100
      %p103 = scmp.ne.s32.totalorder %s86, %s102
      %p104 = scmp.eq.s32.totalorder %s26, 0
      %p105 = por %p103, %p104
      %s107 = sadd.s32 %s106, 1
      %p110 = scmp.eq.s32.totalorder %s20, 1
      %p111 = scmp.ne.s32.totalorder %s106, %s108
      %p112 = scmp.eq.s32.totalorder %s20, 0
      %p113 = por %p111, %p112
      %p114 = scmp.ne.s32.totalorder %s106, %s108
      %p115 = scmp.eq.s32.totalorder %s25, 1
      %p116 = por %p114, %p115
      %p117 = scmp.ne.s32.totalorder %s108, %s109
      %p118 = scmp.eq.s32.totalorder %s25, 0
      %p119 = por %p117, %p118
      %p120 = scmp.ne.s32.totalorder %s108, %s109
      %p121 = scmp.eq.s32.totalorder %s26, 1
      %p122 = por %p120, %p121
      %p124 = scmp.ne.s32.totalorder %s109, %s123
      %p125 = scmp.eq.s32.totalorder %s26, 0
      %p126 = por %p124, %p125
      %s128 = sadd.s32 %s127, 1
      %p131 = scmp.eq.s32.totalorder %s20, 1
      %p132 = scmp.ne.s32.totalorder %s127, %s129
      %p133 = scmp.eq.s32.totalorder %s20, 0
      %p134 = por %p132, %p133
      %p135 = scmp.ne.s32.totalorder %s127, %s129
      %p136 = scmp.eq.s32.totalorder %s25, 1
      %p137 = por %p135, %p136
      %p138 = scmp.ne.s32.totalorder %s129, %s130
      %p139 = scmp.eq.s32.totalorder %s25, 0
      %p140 = por %p138, %p139
      %p141 = scmp.ne.s32.totalorder %s129, %s130
      %p142 = scmp.eq.s32.totalorder %s26, 1
      %p143 = por %p141, %p142
      %p145 = scmp.ne.s32.totalorder %s130, %s144
      %p146 = scmp.eq.s32.totalorder %s26, 0
      %p147 = por %p145, %p146
      %s148 = ssub.s32 %s20, %s27
      %p149 = scmp.eq.s32.totalorder %s148, 0
      %s151 = sadd.s32 %s150, 1
      %s152 = scalar_select %p149, %s150, %s151
      %p155 = pneg %p149
      %p156 = scmp.eq.s32.totalorder %s20, 1
      %p157 = por %p155, %p156
      %p158 = scmp.ne.s32.totalorder %s150, %s153
      %p159 = scmp.eq.s32.totalorder %s20, 0
      %p160 = por %p158, %p159
      %p161 = scmp.ne.s32.totalorder %s150, %s153
      %p162 = scmp.eq.s32.totalorder %s25, 1
      %p163 = por %p161, %p162
      %p164 = scmp.ne.s32.totalorder %s153, %s154
      %p165 = scmp.eq.s32.totalorder %s25, 0
      %p166 = por %p164, %p165
      %p167 = scmp.ne.s32.totalorder %s153, %s154
      %p168 = scmp.eq.s32.totalorder %s26, 1
      %p169 = por %p167, %p168
      %p171 = scmp.ne.s32.totalorder %s154, %s170
      %p172 = scmp.eq.s32.totalorder %s26, 0
      %p173 = por %p171, %p172
      %p174 = scmp.le.s32.totalorder 1, %s20
      %p175 = scmp.lt.s32.totalorder %s20, 3
      %p176 = pnand %p174, %p175
      %p177 = pneg %p176
      // Predicated region
      $region9: #{tpu_custom_call.1} parent=5 // pred_check
        _
      $region10: #{tpu_custom_call.1} parent=5 // pred_check_branch
        %179 = sbr.rel (%p176) target = $region12
      $region11: #{tpu_custom_call.1} parent=5 // pred_region
        %s180 = ssub.s32 %s20, 1
        // Predicated region
        $region13: #{tpu_custom_call.1} parent=11 // pred_check
          %p181 = pneg %p119
        $region14: #{tpu_custom_call.1} parent=11 // pred_check_branch
          %183 = sbr.rel (%p181) target = $region16
        $region15: #{tpu_custom_call.1} parent=11 // pred_region
          _
        $region16: #{tpu_custom_call.1} parent=11 // pred_fallthru
          _
        // Predicated region
        $region17: #{tpu_custom_call.1} parent=11 // pred_check
          %p184 = pneg %p140
        $region18: #{tpu_custom_call.1} parent=11 // pred_check_branch
          %186 = sbr.rel (%p184) target = $region20
        $region19: #{tpu_custom_call.1} parent=11 // pred_region
          _
        $region20: #{tpu_custom_call.1} parent=11 // pred_fallthru
          _
      $region12: #{tpu_custom_call.1} parent=5 // pred_fallthru
        _
      %p187 = scmp.lt.s32.totalorder %s20, 2
      // Predicated region
      $region21: #{tpu_custom_call.1} parent=5 // pred_check
        %p188 = pneg %p187
      $region22: #{tpu_custom_call.1} parent=5 // pred_check_branch
        %190 = sbr.rel (%p188) target = $region24
      $region23: #{tpu_custom_call.1} parent=5 // pred_region
        // Predicated region
        $region25: #{tpu_custom_call.1} parent=23 // pred_check
          %p191 = pneg %p40
        $region26: #{tpu_custom_call.1} parent=23 // pred_check_branch
          %193 = sbr.rel (%p191) target = $region28
        $region27: #{tpu_custom_call.1} parent=23 // pred_region
          %s194 = sand.u32 %s30, 1
          %s195 = scalar_lea.sflag [#allocation3], %s194
          %s196 = sand.u32 %s30, 1
          %s197 = smul.addr %s196, 32
          %s198 = scalar_lea.vmem [#allocation2], %s197
          %s200 = ssub.s32 512, 512
          %201 = vsyncadd %s195, %s200
          %s202 = smul.addr %s20, 4
          %s203 = smul.addr %s202, 128
          %s204 = scalar_lea.hbm %s0, %s203
          %s205 = sshll.u32 %s198, 4
          %s206 = int_to_ptr.vmem [resolvable:$true] %s205
          %211 = dma.hbm_to_vmem [thread:$0]  %s204, 512, %s206, %s195, 256, 256, 16
        $region28: #{tpu_custom_call.1} parent=23 // pred_fallthru
          _
        // Predicated region
        $region29: #{tpu_custom_call.1} parent=23 // pred_check
          %p212 = pneg %p66
        $region30: #{tpu_custom_call.1} parent=23 // pred_check_branch
          %214 = sbr.rel (%p212) target = $region32
        $region31: #{tpu_custom_call.1} parent=23 // pred_region
          %s215 = sand.u32 %s20, 1
          %s216 = scalar_lea.sflag [#allocation6], %s215
          %s217 = sand.u32 %s56, 1
          %s218 = smul.addr %s217, 32
          %s219 = scalar_lea.vmem [#allocation5], %s218
          %s221 = ssub.s32 512, 512
          %222 = vsyncadd %s216, %s221
          %s223 = smul.addr %s20, 4
          %s224 = smul.addr %s223, 128
          %s225 = scalar_lea.hbm %s1, %s224
          %s226 = sshll.u32 %s219, 4
          %s227 = int_to_ptr.vmem [resolvable:$true] %s226
          %232 = dma.hbm_to_vmem [thread:$0]  %s225, 512, %s227, %s216, 256, 256, 16
        $region32: #{tpu_custom_call.1} parent=23 // pred_fallthru
          _
        // Predicated region
        $region33: #{tpu_custom_call.1} parent=23 // pred_check
          %p233 = pneg %p92
        $region34: #{tpu_custom_call.1} parent=23 // pred_check_branch
          %235 = sbr.rel (%p233) target = $region36
        $region35: #{tpu_custom_call.1} parent=23 // pred_region
          %s236 = sand.u32 %s20, 1
          %s237 = scalar_lea.sflag [#allocation6], %s236
          %s238 = sand.u32 %s82, 1
          %s239 = smul.addr %s238, 32
          %s240 = scalar_lea.vmem [#allocation7], %s239
          %s242 = ssub.s32 512, 512
          %243 = vsyncadd %s237, %s242
          %s244 = smul.addr %s20, 4
          %s245 = smul.addr %s244, 128
          %s246 = scalar_lea.hbm %s2, %s245
          %s247 = sshll.u32 %s240, 4
          %s248 = int_to_ptr.vmem [resolvable:$true] %s247
          %253 = dma.hbm_to_vmem [thread:$0]  %s246, 512, %s248, %s237, 256, 256, 16
        $region36: #{tpu_custom_call.1} parent=23 // pred_fallthru
          _
      $region24: #{tpu_custom_call.1} parent=5 // pred_fallthru
        _
      %p254 = scmp.le.s32.totalorder 1, %s20
      %p255 = scmp.lt.s32.totalorder %s20, 3
      %p256 = pnand %p254, %p255
      %p257 = pneg %p256
      // Predicated region
      $region37: #{tpu_custom_call.1} parent=5 // pred_check
        _
      $region38: #{tpu_custom_call.1} parent=5 // pred_check_branch
        %259 = sbr.rel (%p256) target = $region40
      $region39: #{tpu_custom_call.1} parent=5 // pred_region
        %s260 = ssub.s32 %s20, 1
        %s261 = sand.u32 %s33, 1
        %s262 = scalar_lea.sflag [#allocation3], %s261
        %s263 = sand.u32 %s33, 1
        %s264 = smul.addr %s263, 32
        %s265 = scalar_lea.vmem [#allocation2], %s264
        // Predicated region
        $region41: #{tpu_custom_call.1} parent=39 // pred_check
          %p266 = pneg %p46
        $region42: #{tpu_custom_call.1} parent=39 // pred_check_branch
          %268 = sbr.rel (%p266) target = $region44
        $region43: #{tpu_custom_call.1} parent=39 // pred_region
          %269 = dma.done %s262, 512
        $region44: #{tpu_custom_call.1} parent=39 // pred_fallthru
          _
        %s270 = sand.u32 %s25, 1
        %s271 = scalar_lea.sflag [#allocation6], %s270
        %s272 = sand.u32 %s59, 1
        %s273 = smul.addr %s272, 32
        %s274 = scalar_lea.vmem [#allocation5], %s273
        // Predicated region
        $region45: #{tpu_custom_call.1} parent=39 // pred_check
          %p275 = pneg %p72
        $region46: #{tpu_custom_call.1} parent=39 // pred_check_branch
          %277 = sbr.rel (%p275) target = $region48
        $region47: #{tpu_custom_call.1} parent=39 // pred_region
          %278 = dma.done %s271, 512
        $region48: #{tpu_custom_call.1} parent=39 // pred_fallthru
          _
        %s279 = sand.u32 %s25, 1
        %s280 = scalar_lea.sflag [#allocation6], %s279
        %s281 = sand.u32 %s85, 1
        %s282 = smul.addr %s281, 32
        %s283 = scalar_lea.vmem [#allocation7], %s282
        // Predicated region
        $region49: #{tpu_custom_call.1} parent=39 // pred_check
          %p284 = pneg %p98
        $region50: #{tpu_custom_call.1} parent=39 // pred_check_branch
          %286 = sbr.rel (%p284) target = $region52
        $region51: #{tpu_custom_call.1} parent=39 // pred_region
          %287 = dma.done %s280, 512
        $region52: #{tpu_custom_call.1} parent=39 // pred_fallthru
          _
        %s288 = sand.u32 %s33, 1
        %s289 = scalar_lea.sflag [#allocation3], %s288
        %s290 = sand.u32 %s33, 1
        %s291 = smul.addr %s290, 32
        %s292 = scalar_lea.vmem [#allocation2], %s291
        %p293 = pneg %p46
        %p294 = pneg %p43
        %s295 = sand.u32 %s25, 1
        %s296 = scalar_lea.sflag [#allocation6], %s295
        %s297 = sand.u32 %s59, 1
        %s298 = smul.addr %s297, 32
        %s299 = scalar_lea.vmem [#allocation5], %s298
        %p300 = pneg %p72
        %p301 = pneg %p69
        %s302 = sand.u32 %s25, 1
        %s303 = scalar_lea.sflag [#allocation6], %s302
        %s304 = sand.u32 %s85, 1
        %s305 = smul.addr %s304, 32
        %s306 = scalar_lea.vmem [#allocation7], %s305
        %p307 = pneg %p98
        %p308 = pneg %p95
        %p309 = pneg %p119
        %p310 = pneg %p116
        %p311 = pneg %p140
        %p312 = pneg %p137
        %p313 = pneg %p166
        %p314 = pneg %p163
        %s315 = sand.u32 %s153, 1
        %s316 = scalar_lea.sflag [#allocation4], %s315
        %s317 = sand.u32 %s153, 1
        %s318 = smul.addr %s317, 96
        %s319 = scalar_lea.vmem [#allocation8], %s318
        %v320 = vld [vmem:[%s265] sm:$0xff]
        %v321 = vld [vmem:[%s265 + $0x8] sm:$0xff]
        %v322 = vld [vmem:[%s265 + $0x10] sm:$0xff]
        %v323 = vld [vmem:[%s265 + $0x18] sm:$0xff]
        %v324 = vld [vmem:[%s274] sm:$0xff]
        %v325 = vld [vmem:[%s274 + $0x8] sm:$0xff]
        %v326 = vld [vmem:[%s274 + $0x10] sm:$0xff]
        %v327 = vld [vmem:[%s274 + $0x18] sm:$0xff]
        %v328 = vld [vmem:[%s283] sm:$0xff]
        %v329 = vld [vmem:[%s283 + $0x8] sm:$0xff]
        %v330 = vld [vmem:[%s283 + $0x10] sm:$0xff]
        %v331 = vld [vmem:[%s283 + $0x18] sm:$0xff]
        %v332 = vadd.f32 %v320, %v321
        %333 = vadd.xlane.f32.xlu0 %v332
        %v334 = vpop.xlane.xlu0 %333
        %v335 = vadd.f32 %v322, %v323
        %336 = vadd.xlane.f32.xlu0 %v335
        %v337 = vpop.xlane.xlu0 %336
        %v338 = vrcp.pop 256.0
        %v339 = vmul.f32 %v334, %v338
        %v340 = vmul.f32 %v337, %v338
        %v341 = vadd.f32 %v324, %v325
        %342 = vadd.xlane.f32.xlu0 %v341
        %v343 = vpop.xlane.xlu0 %342
        %v344 = vadd.f32 %v326, %v327
        %345 = vadd.xlane.f32.xlu0 %v344
        %v346 = vpop.xlane.xlu0 %345
        %v347 = vmul.f32 %v343, %v338
        %v348 = vmul.f32 %v346, %v338
        %v349 = vadd.f32 %v328, %v329
        %350 = vadd.xlane.f32.xlu0 %v349
        %v351 = vpop.xlane.xlu0 %350
        %v352 = vadd.f32 %v330, %v331
        %353 = vadd.xlane.f32.xlu0 %v352
        %v354 = vpop.xlane.xlu0 %353
        %v355 = vmul.f32 %v351, %v338
        %v356 = vmul.f32 %v354, %v338
        %v359 = vlaneseq
        %v360 = vand.u32 %v359, 127
        %v361 = vlaneseq
        %v362 = vshrl.u32 %v361, 7
        %v363 = vsub.s32 %v360, %v362
        %v364 = vrot.slane %v339, %v363
        %v365 = vadd.s32 %v360, 4294967288
        %v366 = vlaneseq
        %v367 = vshrl.u32 %v366, 7
        %v368 = vsub.s32 %v365, %v367
        %v369 = vrot.slane %v340, %v368
        %vm370 = vcmask 130112
        %v371 = vsel %vm370, %v369, %v364
        %v375 = vadd.s32 %v360, 4294967280
        %v376 = vlaneseq
        %v377 = vshrl.u32 %v376, 7
        %v378 = vsub.s32 %v375, %v377
        %v379 = vrot.slane %v347, %v378
        %v380 = vadd.s32 %v360, 4294967272
        %v381 = vlaneseq
        %v382 = vshrl.u32 %v381, 7
        %v383 = vsub.s32 %v380, %v382
        %v384 = vrot.slane %v348, %v383
        %vm385 = vcmask 261312
        %v386 = vsel %vm385, %v384, %v379
        %v390 = vadd.s32 %v360, 4294967264
        %v391 = vlaneseq
        %v392 = vshrl.u32 %v391, 7
        %v393 = vsub.s32 %v390, %v392
        %v394 = vrot.slane %v355, %v393
        %v395 = vadd.s32 %v360, 4294967256
        %v396 = vlaneseq
        %v397 = vshrl.u32 %v396, 7
        %v398 = vsub.s32 %v395, %v397
        %v399 = vrot.slane %v356, %v398
        %vm400 = vcmask 392512
        %v401 = vsel %vm400, %v399, %v394
        %vm403 = vcmask 130048
        %v404 = vsel %vm403, %v371, %v386
        %vm405 = vcmask 261120
        %v406 = vsel %vm405, %v404, %v401
        %v407 = vld [vmem:[%s3] sm:$0xff]
        %v408 = vld [vmem:[%s3 + $0x8] sm:$0xff]
        %v409 = vld [vmem:[%s3 + $0x10] sm:$0xff]
        %v410 = vld [vmem:[%s3 + $0x18] sm:$0xff]
        %v411 = vld [vmem:[%s3 + $0x20] sm:$0xff]
        %v412 = vld [vmem:[%s3 + $0x28] sm:$0xff]
        %vm413 = vcmask 392192
        %v415 = vsel %vm413, %v406, 0
        %417 = vmatprep.subr.mxu0 0.0
        %418 = vmatpush1.msra.mxu0 %v407
        %419 = vmatprep.subr.mxu0 0.0
        %420 = vmatpush1.msra.mxu0 %v408
        %421 = vmatprep.subr.mxu0 0.0
        %422 = vmatpush1.msra.mxu0 %v409
        %423 = vmatprep.subr.mxu0 0.0
        %424 = vmatpush1.msra.mxu0 %v410
        %425 = vmatprep.subr.mxu0 0.0
        %426 = vmatpush1.msra.mxu0 %v411
        %427 = vmatprep.subr.mxu0 0.0
        %428 = vmatpush1.msra.mxu0 %v412
        %429 = vmatprep.subr.mxu0 0.0
        %430 = vmatpush1.msra.mxu0 0.0
        %431 = vmatprep.subr.mxu0 0.0
        %432 = vmatpush1.msra.mxu0 0.0
        %433 = vmatprep.subr.mxu0 0.0
        %434 = vmatpush1.msra.mxu0 0.0
        %435 = vmatprep.subr.mxu0 0.0
        %436 = vmatpush1.msra.mxu0 0.0
        %437 = vmatprep.subr.mxu0 0.0
        %438 = vmatpush1.msra.mxu0 0.0
        %439 = vmatprep.subr.mxu0 0.0
        %440 = vmatpush1.msra.mxu0 0.0
        %441 = vmatprep.subr.mxu0 0.0
        %442 = vmatpush1.msra.mxu0 0.0
        %443 = vmatprep.subr.mxu0 0.0
        %444 = vmatpush1.msra.mxu0 0.0
        %445 = vmatprep.subr.mxu0 0.0
        %446 = vmatpush1.msra.mxu0 0.0
        %447 = vmatprep.subr.mxu0 0.0
        %448 = vmatpush1.msra.mxu0 0.0
        %449 = vmatprep.subr.mxu0 0.0
        %450 = vmatpush1.msra.mxu0 0.0
        %451 = vmatprep.subr.mxu0 0.0
        %452 = vmatpush1.msra.mxu0 0.0
        %453 = vmatprep.subr.mxu0 0.0
        %454 = vmatpush1.msra.mxu0 0.0
        %455 = vmatprep.subr.mxu0 0.0
        %456 = vmatpush1.msra.mxu0 0.0
        %457 = vmatprep.subr.mxu0 0.0
        %458 = vmatpush1.msra.mxu0 0.0
        %459 = vmatprep.subr.mxu0 0.0
        %460 = vmatpush1.msra.mxu0 0.0
        %461 = vmatprep.subr.mxu0 0.0
        %462 = vmatpush1.msra.mxu0 0.0
        %463 = vmatprep.subr.mxu0 0.0
        %464 = vmatpush1.msra.mxu0 0.0
        %465 = vmatprep.subr.mxu0 0.0
        %466 = vmatpush1.msra.mxu0 0.0
        %467 = vmatprep.subr.mxu0 0.0
        %468 = vmatpush1.msra.mxu0 0.0
        %469 = vmatprep.subr.mxu0 0.0
        %470 = vmatpush1.msra.mxu0 0.0
        %471 = vmatprep.subr.mxu0 0.0
        %472 = vmatpush1.msra.mxu0 0.0
        %473 = vmatprep.subr.mxu0 0.0
        %474 = vmatpush1.msra.mxu0 0.0
        %475 = vmatprep.subr.mxu0 0.0
        %476 = vmatpush1.msra.mxu0 0.0
        %477 = vmatprep.subr.mxu0 0.0
        %478 = vmatpush1.msra.mxu0 0.0
        %479 = vmatprep.subr.mxu0 0.0
        %480 = vmatpush1.msra.mxu0 0.0
        %481 = vmatprep.mubr.f32.mxu0 0.0
        %482 = vmatmul.mubr.f32.gmra.mrb[0].mxu0 %v415
        %v483 = vpop.f32.mrb[0].mxu0
        %v484 = vadd.f32 0.0, %v483
        %v485 = vpop.f32.mrb[0].mxu0
        %486 = vdwg.mxu0
        %v487 = vmax.f32 %v484, 0.0
        %v488 = vld [vmem:[%s4] sm:$0x7]
        %vm489 = vcmask 23552
        %v491 = vsel %vm489, %v487, 0
        %vm493 = vcmask 1042432
        %v495 = vsel %vm493, %v488, 0
        %497 = vmatprep.subr.mxu0 0.0
        %498 = vmatpush1.msra.mxu0 %v495
        %499 = vmatprep.subr.mxu0 0.0
        %500 = vmatpush1.msra.mxu0 0.0
        %501 = vmatprep.subr.mxu0 0.0
        %502 = vmatpush1.msra.mxu0 0.0
        %503 = vmatprep.subr.mxu0 0.0
        %504 = vmatpush1.msra.mxu0 0.0
        %505 = vmatprep.subr.mxu0 0.0
        %506 = vmatpush1.msra.mxu0 0.0
        %507 = vmatprep.subr.mxu0 0.0
        %508 = vmatpush1.msra.mxu0 0.0
        %509 = vmatprep.subr.mxu0 0.0
        %510 = vmatpush1.msra.mxu0 0.0
        %511 = vmatprep.subr.mxu0 0.0
        %512 = vmatpush1.msra.mxu0 0.0
        %513 = vmatprep.subr.mxu0 0.0
        %514 = vmatpush1.msra.mxu0 0.0
        %515 = vmatprep.subr.mxu0 0.0
        %516 = vmatpush1.msra.mxu0 0.0
        %517 = vmatprep.subr.mxu0 0.0
        %518 = vmatpush1.msra.mxu0 0.0
        %519 = vmatprep.subr.mxu0 0.0
        %520 = vmatpush1.msra.mxu0 0.0
        %521 = vmatprep.subr.mxu0 0.0
        %522 = vmatpush1.msra.mxu0 0.0
        %523 = vmatprep.subr.mxu0 0.0
        %524 = vmatpush1.msra.mxu0 0.0
        %525 = vmatprep.subr.mxu0 0.0
        %526 = vmatpush1.msra.mxu0 0.0
        %527 = vmatprep.subr.mxu0 0.0
        %528 = vmatpush1.msra.mxu0 0.0
        %529 = vmatprep.subr.mxu0 0.0
        %530 = vmatpush1.msra.mxu0 0.0
        %531 = vmatprep.subr.mxu0 0.0
        %532 = vmatpush1.msra.mxu0 0.0
        %533 = vmatprep.subr.mxu0 0.0
        %534 = vmatpush1.msra.mxu0 0.0
        %535 = vmatprep.subr.mxu0 0.0
        %536 = vmatpush1.msra.mxu0 0.0
        %537 = vmatprep.subr.mxu0 0.0
        %538 = vmatpush1.msra.mxu0 0.0
        %539 = vmatprep.subr.mxu0 0.0
        %540 = vmatpush1.msra.mxu0 0.0
        %541 = vmatprep.subr.mxu0 0.0
        %542 = vmatpush1.msra.mxu0 0.0
        %543 = vmatprep.subr.mxu0 0.0
        %544 = vmatpush1.msra.mxu0 0.0
        %545 = vmatprep.subr.mxu0 0.0
        %546 = vmatpush1.msra.mxu0 0.0
        %547 = vmatprep.subr.mxu0 0.0
        %548 = vmatpush1.msra.mxu0 0.0
        %549 = vmatprep.subr.mxu0 0.0
        %550 = vmatpush1.msra.mxu0 0.0
        %551 = vmatprep.subr.mxu0 0.0
        %552 = vmatpush1.msra.mxu0 0.0
        %553 = vmatprep.subr.mxu0 0.0
        %554 = vmatpush1.msra.mxu0 0.0
        %555 = vmatprep.subr.mxu0 0.0
        %556 = vmatpush1.msra.mxu0 0.0
        %557 = vmatprep.subr.mxu0 0.0
        %558 = vmatpush1.msra.mxu0 0.0
        %559 = vmatprep.subr.mxu0 0.0
        %560 = vmatpush1.msra.mxu0 0.0
        %561 = vmatprep.mubr.f32.mxu0 0.0
        %562 = vmatmul.mubr.f32.gmra.mrb[0].mxu0 %v491
        %v563 = vpop.f32.mrb[0].mxu0
        %v564 = vadd.f32 0.0, %v563
        %v565 = vpop.f32.mrb[0].mxu0
        %566 = vdwg.mxu0
        %v567 = vxor.u32 %v564, 2147483648
        %v568 = vmul.f32 %v567, 1.442695
        %v569 = vpow.pop %v568
        %v570 = vadd.f32 %v569, 1.0
        %v571 = vrcp.pop %v570
        %v572 = vmul.f32 1.0, %v571
        %v573 = vlaneseq
        %v574 = vshrl.u32 %v573, 7
        %v575 = vsub.s32 0, %v574
        %v576 = vrot.slane %v572, %v575
        %578 = vbcast.lane.b32.xlu0 %v576, 256
        %v579 = vpop.permute.xlu0 %578
        %s581 = sor.u32 256, 8
        %582 = vbcast.lane.b32.xlu0 %v576, %s581
        %v583 = vpop.permute.xlu0 %582
        %v584 = vmul.f32 %v320, %v579
        %v585 = vmul.f32 %v321, %v579
        %v586 = vmul.f32 %v322, %v583
        %v587 = vmul.f32 %v323, %v583
        %588 = vst [vmem:[%s319] sm:$0xff] %v584
        %589 = vst [vmem:[%s319 + $0x8] sm:$0xff] %v585
        %590 = vst [vmem:[%s319 + $0x10] sm:$0xff] %v586
        %591 = vst [vmem:[%s319 + $0x18] sm:$0xff] %v587
        %s593 = sor.u32 256, 16
        %594 = vbcast.lane.b32.xlu0 %v576, %s593
        %v595 = vpop.permute.xlu0 %594
        %s597 = sor.u32 256, 24
        %598 = vbcast.lane.b32.xlu0 %v576, %s597
        %v599 = vpop.permute.xlu0 %598
        %v600 = vmul.f32 %v324, %v595
        %v601 = vmul.f32 %v325, %v595
        %v602 = vmul.f32 %v326, %v599
        %v603 = vmul.f32 %v327, %v599
        %604 = vst [vmem:[%s319 + $0x20] sm:$0xff] %v600
        %605 = vst [vmem:[%s319 + $0x28] sm:$0xff] %v601
        %606 = vst [vmem:[%s319 + $0x30] sm:$0xff] %v602
        %607 = vst [vmem:[%s319 + $0x38] sm:$0xff] %v603
        %s609 = sor.u32 256, 32
        %610 = vbcast.lane.b32.xlu0 %v576, %s609
        %v611 = vpop.permute.xlu0 %610
        %s613 = sor.u32 256, 40
        %614 = vbcast.lane.b32.xlu0 %v576, %s613
        %v615 = vpop.permute.xlu0 %614
        %v616 = vmul.f32 %v328, %v611
        %v617 = vmul.f32 %v329, %v611
        %v618 = vmul.f32 %v330, %v615
        %v619 = vmul.f32 %v331, %v615
        %620 = vst [vmem:[%s319 + $0x40] sm:$0xff] %v616
        %621 = vst [vmem:[%s319 + $0x48] sm:$0xff] %v617
        %622 = vst [vmem:[%s319 + $0x50] sm:$0xff] %v618
        %623 = vst [vmem:[%s319 + $0x58] sm:$0xff] %v619
        %s624 = sand.u32 %s153, 1
        %s625 = scalar_lea.sflag [#allocation4], %s624
        %s626 = sand.u32 %s153, 1
        %s627 = smul.addr %s626, 96
        %s628 = scalar_lea.vmem [#allocation8], %s627
        // Predicated region
        $region53: #{tpu_custom_call.1} parent=39 // pred_check
          %p629 = pneg %p163
        $region54: #{tpu_custom_call.1} parent=39 // pred_check_branch
          %631 = sbr.rel (%p629) target = $region56
        $region55: #{tpu_custom_call.1} parent=39 // pred_region
          %s633 = ssub.s32 1536, 1536
          %634 = vsyncadd %s625, %s633
          %s635 = smul.addr %s25, 12
          %s636 = smul.addr %s635, 128
          %s637 = scalar_lea.hbm %s5, %s636
          %s638 = sshll.u32 %s628, 4
          %s639 = int_to_ptr.vmem [resolvable:$true] %s638
          %644 = dma.vmem_to_hbm [thread:$0]  %s639, 1536, %s637, %s625, 256, 256, 16
        $region56: #{tpu_custom_call.1} parent=39 // pred_fallthru
          _
      $region40: #{tpu_custom_call.1} parent=5 // pred_fallthru
        _
      %p645 = scmp.le.s32.totalorder 2, %s20
      // Predicated region
      $region57: #{tpu_custom_call.1} parent=5 // pred_check
        %p646 = pneg %p645
      $region58: #{tpu_custom_call.1} parent=5 // pred_check_branch
        %648 = sbr.rel (%p646) target = $region60
      $region59: #{tpu_custom_call.1} parent=5 // pred_region
        %s649 = ssub.s32 %s20, 2
        // Predicated region
        $region61: #{tpu_custom_call.1} parent=59 // pred_check
          %p650 = pneg %p169
        $region62: #{tpu_custom_call.1} parent=59 // pred_check_branch
          %652 = sbr.rel (%p650) target = $region64
        $region63: #{tpu_custom_call.1} parent=59 // pred_region
          %s653 = sand.u32 %s154, 1
          %s654 = scalar_lea.sflag [#allocation4], %s653
          %s655 = sand.u32 %s154, 1
          %s656 = smul.addr %s655, 96
          %s657 = scalar_lea.vmem [#allocation8], %s656
          %658 = dma.done %s654, 1536
        $region64: #{tpu_custom_call.1} parent=59 // pred_fallthru
          _
      $region60: #{tpu_custom_call.1} parent=5 // pred_fallthru
        _
    $region6: #{tpu_custom_call.1} parent=1 // loop_footer
      %s24 = sadd.s32 1, %s20
    $region7: #{tpu_custom_call.1} parent=1 // loop_footer_branch
      %19 = sbr.rel target = $region3
    $region8: #{tpu_custom_call.1} parent=1 // loop_exit
      _
    %659 = vsyncpa [#allocation3], 1
    %s660 = scalar_lea.sflag [#allocation3], 1
    %661 = vsyncpa %s660, 1
    %662 = vsyncpa [#allocation6], 1
    %s663 = scalar_lea.sflag [#allocation6], 1
    %664 = vsyncpa %s663, 1
    %665 = vsyncpa [#allocation4], 1
    %s666 = scalar_lea.sflag [#allocation4], 1
    %667 = vsyncpa %s666, 1

</llo_original>
